<compile_context>
chip_gen: v7x
topology: tpu7x:2x2x1
jax: 0.10.0
libtpu: 0.0.40
codegen_flags: <defaults>
</compile_context>

<pallas_src>
import functools
import math

import jax
import jax.numpy as jnp
from jax.experimental import pallas as pl
from jax.experimental.pallas import tpu as pltpu

# Weight-slab row offsets (lane dim = 128, dtype bf16).
_R_WQ1 = 0        # (64, obs)
_R_WQ2 = 64       # (64, 64)
_R_WA1 = 128      # (128, A)
_R_WA2 = 256      # (64, 128)
_R_WADV1A = 320   # (64, 64)   advantage1 half multiplying a_out
_R_WADV1Q = 384   # (64, 64)   advantage1 half multiplying q_f
_R_WADV2 = 448    # (1, 64)
_SLAB_ROWS = 456  # padded to a multiple of 8

# Bias-slab column assignment (shape (128, 8), f32, biases stored as columns).
_C_BQ1, _C_BQ2, _C_BA1, _C_BA2, _C_BADV1, _C_BADV2 = 0, 1, 2, 3, 4, 5


def aql_kernel(state_ref, a_ref, e_ref, w_ref, b_ref, out_ref, *, obs_dim, act_dim):
    f32, bf16 = jnp.float32, jnp.bfloat16

    def w(r0, nrows, ncols):          # static bf16 slab slice (nrows, ncols)
        return w_ref[pl.ds(r0, nrows), pl.ds(0, ncols)]

    def bcol(col, nrows):             # static f32 bias column (nrows, 1)
        return b_ref[pl.ds(0, nrows), pl.ds(col, 1)]

    s = state_ref[...].astype(bf16)   # (obs, B)   state columns, batch on lanes
    a = a_ref[...].astype(bf16)       # (A, C)     samples on lanes
    e = e_ref[...].astype(bf16)       # (B, C)     0/1 batch->sample selection (exact in bf16)

    # ---- q_feature path, batched over the B batch columns (hoisted, tiny) ----
    qh = jnp.maximum(jnp.dot(w(_R_WQ1, 64, obs_dim), s, preferred_element_type=f32)
                     + bcol(_C_BQ1, 64), 0.0)                                      # (64, B)
    qf = jnp.maximum(jnp.dot(w(_R_WQ2, 64, 64), qh.astype(bf16),
                             preferred_element_type=f32) + bcol(_C_BQ2, 64), 0.0)  # (64, B)
    # q_f half of advantage1 with badv1 folded in BEFORE the lane expansion.
    qc = jnp.dot(w(_R_WADV1Q, 64, 64), qf.astype(bf16),
                 preferred_element_type=f32) + bcol(_C_BADV1, 64)                  # (64, B)
    # Lane expansion (64, B) -> (64, C) via the 0/1 selection matmul.
    qc_bt = jnp.dot(qc.astype(bf16), e, preferred_element_type=f32)                # (64, C)

    # ---- action path over the flattened samples (samples stay on lanes) ----
    ah = jnp.maximum(jnp.dot(w(_R_WA1, 128, act_dim), a, preferred_element_type=f32)
                     + bcol(_C_BA1, 128), 0.0)                                     # (128, C)
    a_out = jnp.maximum(jnp.dot(w(_R_WA2, 64, 128), ah.astype(bf16),
                                preferred_element_type=f32) + bcol(_C_BA2, 64), 0.0)  # (64, C)

    # advantage1 on ReLU(concat([a_out, q_f_rep])): outer ReLU is a no-op (both
    # halves already ReLU'd); the (64,128) weight is split into its two halves.
    adv = jnp.maximum(jnp.dot(w(_R_WADV1A, 64, 64), a_out.astype(bf16),
                              preferred_element_type=f32) + qc_bt, 0.0)            # (64, C)

    # advantage2: (1,64)@(64,C) -> lane-dense (1, C) row, stored unmasked.
    q = jnp.dot(w(_R_WADV2, 1, 64), adv.astype(bf16),
                preferred_element_type=f32) + bcol(_C_BADV2, 1)                    # (1, C)
    out_ref[...] = q


def _pack_weight_slab(params, obs_dim, act_dim):
    """Single lane-dense bf16 slab (456, 128) holding all matmul weights."""
    assert obs_dim <= 128 and act_dim <= 128  # TODO(synk): chunk input feature dims > 128
    def pad(wm, rows):
        return jnp.pad(wm, ((0, rows - wm.shape[0]), (0, 128 - wm.shape[1])))
    blocks = [pad(params["wq1"], 64), pad(params["wq2"], 64),
              pad(params["wa1"], 128), pad(params["wa2"], 64),
              pad(params["wadv1"][:, :64], 64),   # a_out half (concat order: a_out first)
              pad(params["wadv1"][:, 64:], 64),   # q_f half
              pad(params["wadv2"], 8)]
    slab = jnp.concatenate(blocks, axis=0).astype(jnp.bfloat16)
    assert slab.shape == (_SLAB_ROWS, 128)
    return slab


def _pack_bias_slab(params):
    """All biases packed as columns of one (128, 8) f32 slab (column-oriented math)."""
    def col(b):
        b = b.reshape(-1).astype(jnp.float32)
        return jnp.pad(b, (0, 128 - b.shape[0]))[:, None]
    zeros = jnp.zeros((128, 1), jnp.float32)
    return jnp.concatenate([col(params["bq1"]), col(params["bq2"]), col(params["ba1"]),
                            col(params["ba2"]), col(params["badv1"]), col(params["badv2"]),
                            zeros, zeros], axis=1)


def aql_forward(state, a_mu, params):
    """q_values = AQL.forward(state, a_mu); state (B, obs), a_mu (B, T, A) -> (B, T)."""
    B, T, A = a_mu.shape
    assert state.shape[0] == B, "state / a_mu batch dims must match"
    obs = state.shape[1]

    N = B * T
    LANE = 128
    # Single step when the flattened sample axis is small; 512-lane chunks otherwise.
    C = ((N + LANE - 1) // LANE) * LANE if N <= 512 else 512
    n_chunks = pl.cdiv(N, C)
    n_pad = n_chunks * C

    # Present inputs with the per-sample axis on lanes.
    state_t = jnp.swapaxes(state, 0, 1)                          # (obs, B), tiny
    # TODO(synk): for production-sized a_mu, replace this wrapper-side transpose (an
    # extra HBM read+write of a_mu) with an in-kernel XLU transpose of each tile.
    a_t = jnp.swapaxes(a_mu.reshape(N, A), 0, 1)                 # (A, N)
    a_t = jnp.pad(a_t, ((0, 0), (0, n_pad - N)))                 # (A, n_pad)

    # 0/1 selection matrix: E[b, n] = 1 iff flattened sample n belongs to batch b.
    n_idx = jnp.arange(n_pad)
    e = ((n_idx[None, :] // T) == jnp.arange(B)[:, None]).astype(jnp.float32)  # (B, n_pad)

    w_slab = _pack_weight_slab(params, obs, A)                   # (456, 128) bf16
    b_slab = _pack_bias_slab(params)                             # (128, 8)  f32

    in_specs = [
        pl.BlockSpec((obs, B), lambda i: (0, 0)),                # state: VMEM-resident
        pl.BlockSpec((A, C), lambda i: (0, i)),                  # a_mu chunk: pipelined
        pl.BlockSpec((B, C), lambda i: (0, i)),                  # selection chunk: pipelined
        pl.BlockSpec(w_slab.shape, lambda i: (0, 0)),            # weight slab: resident
        pl.BlockSpec(b_slab.shape, lambda i: (0, 0)),            # bias slab: resident
    ]
    out_spec = pl.BlockSpec((1, C), lambda i: (0, i))            # lane-dense output row

    flops = int(2 * n_pad * (A * 128 + 128 * 64 + 64 * 64 + 64 * B + 64)
                + 2 * B * (obs * 64 + 64 * 64 + 64 * 64))
    bytes_accessed = int(4 * (state.size + a_t.size + e.size + b_slab.size + n_pad)
                         + 2 * w_slab.size)
    cost = pl.CostEstimate(flops=flops, transcendentals=0, bytes_accessed=bytes_accessed)

    # Megacore split only pays off when there are multiple chunks of work.
    sem = ("arbitrary",) if n_chunks == 1 else ("parallel",)

    q = pl.pallas_call(
        functools.partial(aql_kernel, obs_dim=obs, act_dim=A),
        out_shape=jax.ShapeDtypeStruct((1, n_pad), jnp.float32),
        grid=(n_chunks,),
        in_specs=in_specs,
        out_specs=out_spec,
        compiler_params=pltpu.CompilerParams(
            dimension_semantics=sem,
            vmem_limit_bytes=32 * 1024 * 1024,   # ~0.2 MB actually used; plenty on v5e/v6e/v7x
        ),
        cost_estimate=cost,
    )(state_t, a_t, e, w_slab, b_slab)
    return q[0, :N].reshape(B, T)


# ---------------- deterministic parameter construction (glue) ----------------

def _scale_noise(key, size):
    x = jax.random.normal(key, (size,), jnp.float32)
    return jnp.sign(x) * jnp.sqrt(jnp.abs(x))


def _noisy_linear_effective(key, in_f, out_f, std_init=0.4):
    """Effective (training-mode) weight/bias of NoisyLinear, as (out, in) / (out,)."""
    k_wmu, k_bmu, k_ein, k_eout, k_eb = jax.random.split(key, 5)
    mu_range = 1.0 / math.sqrt(in_f)
    w_mu = jax.random.uniform(k_wmu, (out_f, in_f), jnp.float32, -mu_range, mu_range)
    w_sigma = jnp.full((out_f, in_f), std_init / math.sqrt(in_f), jnp.float32)
    b_mu = jax.random.uniform(k_bmu, (out_f,), jnp.float32, -mu_range, mu_range)
    b_sigma = jnp.full((out_f,), std_init / math.sqrt(out_f), jnp.float32)
    w = w_mu + w_sigma * jnp.outer(_scale_noise(k_eout, out_f), _scale_noise(k_ein, in_f))
    b = b_mu + b_sigma * _scale_noise(k_eb, out_f)
    return w.astype(jnp.float32), b.astype(jnp.float32)


def make_params(key, obs_dim, num_actions):
    """All dense weights stored PyTorch-style (out, in); biases as flat (out,)."""
    ks = jax.random.split(key, 6)

    def lin(k, in_f, out_f):
        kw, kb = jax.random.split(k)
        w = jax.random.normal(kw, (out_f, in_f), jnp.float32) * math.sqrt(2.0 / in_f)
        b = jax.random.normal(kb, (out_f,), jnp.float32) * 0.01
        return w, b

    wq1, bq1 = lin(ks[0], obs_dim, 64)         # q_feature layer 1
    wq2, bq2 = lin(ks[1], 64, 64)              # q_feature layer 2
    wa1, ba1 = lin(ks[2], num_actions, 128)    # action_out layer 1 (continuous branch)
    wa2, ba2 = lin(ks[3], 128, 64)             # action_out layer 2
    wadv1, badv1 = _noisy_linear_effective(ks[4], 128, 64)   # advantage1
    wadv2, badv2 = _noisy_linear_effective(ks[5], 64, 1)     # advantage2
    return dict(wq1=wq1, bq1=bq1, wq2=wq2, bq2=bq2, wa1=wa1, ba1=ba1, wa2=wa2, ba2=ba2,
                wadv1=wadv1, badv1=badv1, wadv2=wadv2, badv2=badv2)


# ---------------- pure-JAX references ----------------

def aql_reference_f32(state, a_mu, params):
    """Row-major f32 HIGHEST-precision reference matching the PyTorch graph."""
    hp = jax.lax.Precision.HIGHEST
    B, T, A = a_mu.shape

    def lin(x, w, b):
        return jnp.dot(x, w.T, precision=hp) + b

    q_f = jax.nn.relu(lin(jax.nn.relu(lin(state, params["wq1"], params["bq1"])),
                          params["wq2"], params["bq2"]))                         # (B, 64)
    a = a_mu.reshape(B * T, A)
    a_out = jax.nn.relu(lin(jax.nn.relu(lin(a, params["wa1"], params["ba1"])),
                            params["wa2"], params["ba2"]))                       # (BT, 64)
    x = jax.nn.relu(jnp.concatenate([a_out, jnp.repeat(q_f, T, axis=0)], axis=-1))
    adv = jax.nn.relu(jnp.dot(x, params["wadv1"].T, precision=hp) + params["badv1"])
    q = jnp.dot(adv, params["wadv2"].T, precision=hp) + params["badv2"]
    return q.reshape(B, T)


def aql_reference_bf16ops(state, a_mu, params):
    """Mirrors the kernel's numerics exactly: bf16 matmul operands, f32 accumulation,
    f32 bias adds, and the bf16 rounding of (q_contrib + badv1) before expansion."""
    bf16, f32 = jnp.bfloat16, jnp.float32
    B, T, A = a_mu.shape

    def mm(x, w):
        return jnp.dot(x.astype(bf16), w.astype(bf16).T, preferred_element_type=f32)

    qh = jax.nn.relu(mm(state, params["wq1"]) + params["bq1"])
    qf = jax.nn.relu(mm(qh, params["wq2"]) + params["bq2"])
    qc = (mm(qf, params["wadv1"][:, 64:]) + params["badv1"]).astype(bf16).astype(f32)  # (B,64)
    a = a_mu.reshape(B * T, A)
    ah = jax.nn.relu(mm(a, params["wa1"]) + params["ba1"])
    a_out = jax.nn.relu(mm(ah, params["wa2"]) + params["ba2"])
    adv = jax.nn.relu(mm(a_out, params["wadv1"][:, :64]) + jnp.repeat(qc, T, axis=0))
    q = mm(adv, params["wadv2"]) + params["badv2"]
    return q.reshape(B, T)


# TODO(synk): Proposal_Network sampling, epsilon-greedy action choice and the CNN
# embedding path are not part of AQL.forward and are not implemented here; NoisyLinear
# noise is folded once at parameter setup (no per-call reset_noise()).

if __name__ == "__main__":
    B, OBS_DIM, NUM_ACTIONS = 2, 8, 4
    PROPOSE_SAMPLE, UNIFORM_SAMPLE = 8, 8
    TOTAL_SAMPLE = PROPOSE_SAMPLE + UNIFORM_SAMPLE   # 16

    key = jax.random.PRNGKey(0)
    k_state, k_amu, k_params = jax.random.split(key, 3)

    state = jax.random.normal(k_state, (B, OBS_DIM), jnp.float32)
    a_mu = jax.random.normal(k_amu, (B, TOTAL_SAMPLE, NUM_ACTIONS), jnp.float32)
    params = make_params(k_params, OBS_DIM, NUM_ACTIONS)

    q_values = aql_forward(state, a_mu, params)
    jax.block_until_ready(q_values)
    assert q_values.shape == (B, TOTAL_SAMPLE) and q_values.dtype == jnp.float32

    # Tight check vs. a reference using identical bf16-operand / f32-accumulate math
    # (differences are only f32 accumulation-order noise).
    q_sim = aql_reference_bf16ops(state, a_mu, params)
    assert jnp.allclose(q_values, q_sim, atol=5e-4, rtol=5e-4), "mismatch vs bf16-op reference"

    # Looser check vs. the full-f32 HIGHEST-precision PyTorch-graph reference; the gap
    # is the expected bf16 matmul-operand rounding (well under 2e-2 at these sizes).
    q_ref = aql_reference_f32(state, a_mu, params)
    assert jnp.allclose(q_values, q_ref, atol=2e-2, rtol=2e-2), "mismatch vs f32 reference"
    print("KERNEL_OK")
</pallas_src>

<mosaic_0001>
module attributes {stable_mosaic.version = 11 : i64} {
  func.func @aql_kernel(%arg0: i32, %arg1: memref<8x2xf32, #tpu.memory_space<vmem>>, %arg2: memref<4x128xf32, #tpu.memory_space<vmem>>, %arg3: memref<2x128xf32, #tpu.memory_space<vmem>>, %arg4: memref<456x128xbf16, #tpu.memory_space<vmem>>, %arg5: memref<128x8xf32, #tpu.memory_space<vmem>>, %arg6: memref<1x128xf32, #tpu.memory_space<vmem>>) attributes {dimension_semantics = [#tpu.dimension_semantics<arbitrary>], iteration_bounds = array<i64: 1>, scalar_prefetch = 0 : i64, scratch_operands = 0 : i64, tpu.core_type = #tpu.core_type<tc>, window_params = [{pipeline_mode = #tpu.pipeline_mode<synchronous>, transform_indices = @transform_0, window_bounds = array<i64: 8, 2>}, {transform_indices = @transform_1, window_bounds = array<i64: 4, 128>}, {transform_indices = @transform_2, window_bounds = array<i64: 2, 128>}, {pipeline_mode = #tpu.pipeline_mode<synchronous>, transform_indices = @transform_3, window_bounds = array<i64: 456, 128>}, {pipeline_mode = #tpu.pipeline_mode<synchronous>, transform_indices = @transform_4, window_bounds = array<i64: 128, 8>}, {transform_indices = @transform_5, window_bounds = array<i64: 1, 128>}]} {
    %c0 = arith.constant 0 : index
    %c0_0 = arith.constant 0 : index
    %0 = vector.load %arg1[%c0, %c0_0] : memref<8x2xf32, #tpu.memory_space<vmem>>, vector<8x2xf32>
    %1 = arith.truncf %0 : vector<8x2xf32> to vector<8x2xbf16>
    %c0_1 = arith.constant 0 : index
    %c0_2 = arith.constant 0 : index
    %2 = vector.load %arg2[%c0_1, %c0_2] : memref<4x128xf32, #tpu.memory_space<vmem>>, vector<4x128xf32>
    %3 = arith.truncf %2 : vector<4x128xf32> to vector<4x128xbf16>
    %c0_3 = arith.constant 0 : index
    %c0_4 = arith.constant 0 : index
    %4 = vector.load %arg3[%c0_3, %c0_4] : memref<2x128xf32, #tpu.memory_space<vmem>>, vector<2x128xf32>
    %5 = arith.truncf %4 : vector<2x128xf32> to vector<2x128xbf16>
    %c0_5 = arith.constant 0 : index
    %c0_6 = arith.constant 0 : index
    %6 = vector.load %arg4[%c0_5, %c0_6] : memref<456x128xbf16, #tpu.memory_space<vmem>>, vector<64x8xbf16>
    %cst = arith.constant dense<0.000000e+00> : vector<64x2xf32>
    %7 = tpu.matmul %6, %1, %cst {dimension_numbers = #tpu.dot_dimension_numbers<[1], [0], [0], [1], [0, 0, 1, 1], [], []>} : vector<64x8xbf16>, vector<8x2xbf16>, vector<64x2xf32> -> vector<64x2xf32>
    %c0_7 = arith.constant 0 : index
    %c0_8 = arith.constant 0 : index
    %8 = vector.load %arg5[%c0_7, %c0_8] : memref<128x8xf32, #tpu.memory_space<vmem>>, vector<64x1xf32>
    %9 = vector.broadcast %8 : vector<64x1xf32> to vector<64x2xf32>
    %10 = arith.addf %7, %9 : vector<64x2xf32>
    %cst_9 = arith.constant 0.000000e+00 : f32
    %11 = vector.broadcast %cst_9 : f32 to vector<64x2xf32>
    %12 = arith.maximumf %10, %11 : vector<64x2xf32>
    %c64 = arith.constant 64 : index
    %c0_10 = arith.constant 0 : index
    %13 = vector.load %arg4[%c64, %c0_10] : memref<456x128xbf16, #tpu.memory_space<vmem>>, vector<64x64xbf16>
    %14 = arith.truncf %12 : vector<64x2xf32> to vector<64x2xbf16>
    %cst_11 = arith.constant dense<0.000000e+00> : vector<64x2xf32>
    %15 = tpu.matmul %13, %14, %cst_11 {dimension_numbers = #tpu.dot_dimension_numbers<[1], [0], [0], [1], [0, 0, 1, 1], [], []>} : vector<64x64xbf16>, vector<64x2xbf16>, vector<64x2xf32> -> vector<64x2xf32>
    %c0_12 = arith.constant 0 : index
    %c1 = arith.constant 1 : index
    %16 = vector.load %arg5[%c0_12, %c1] : memref<128x8xf32, #tpu.memory_space<vmem>>, vector<64x1xf32>
    %17 = vector.broadcast %16 : vector<64x1xf32> to vector<64x2xf32>
    %18 = arith.addf %15, %17 : vector<64x2xf32>
    %cst_13 = arith.constant 0.000000e+00 : f32
    %19 = vector.broadcast %cst_13 : f32 to vector<64x2xf32>
    %20 = arith.maximumf %18, %19 : vector<64x2xf32>
    %c384 = arith.constant 384 : index
    %c0_14 = arith.constant 0 : index
    %21 = vector.load %arg4[%c384, %c0_14] : memref<456x128xbf16, #tpu.memory_space<vmem>>, vector<64x64xbf16>
    %22 = arith.truncf %20 : vector<64x2xf32> to vector<64x2xbf16>
    %cst_15 = arith.constant dense<0.000000e+00> : vector<64x2xf32>
    %23 = tpu.matmul %21, %22, %cst_15 {dimension_numbers = #tpu.dot_dimension_numbers<[1], [0], [0], [1], [0, 0, 1, 1], [], []>} : vector<64x64xbf16>, vector<64x2xbf16>, vector<64x2xf32> -> vector<64x2xf32>
    %c0_16 = arith.constant 0 : index
    %c4 = arith.constant 4 : index
    %24 = vector.load %arg5[%c0_16, %c4] : memref<128x8xf32, #tpu.memory_space<vmem>>, vector<64x1xf32>
    %25 = vector.broadcast %24 : vector<64x1xf32> to vector<64x2xf32>
    %26 = arith.addf %23, %25 : vector<64x2xf32>
    %27 = arith.truncf %26 : vector<64x2xf32> to vector<64x2xbf16>
    %cst_17 = arith.constant dense<0.000000e+00> : vector<64x128xf32>
    %28 = tpu.matmul %27, %5, %cst_17 {dimension_numbers = #tpu.dot_dimension_numbers<[1], [0], [0], [1], [0, 0, 1, 1], [], []>} : vector<64x2xbf16>, vector<2x128xbf16>, vector<64x128xf32> -> vector<64x128xf32>
    %c128 = arith.constant 128 : index
    %c0_18 = arith.constant 0 : index
    %29 = vector.load %arg4[%c128, %c0_18] : memref<456x128xbf16, #tpu.memory_space<vmem>>, vector<128x4xbf16>
    %cst_19 = arith.constant dense<0.000000e+00> : vector<128x128xf32>
    %30 = tpu.matmul %29, %3, %cst_19 {dimension_numbers = #tpu.dot_dimension_numbers<[1], [0], [0], [1], [0, 0, 1, 1], [], []>} : vector<128x4xbf16>, vector<4x128xbf16>, vector<128x128xf32> -> vector<128x128xf32>
    %c0_20 = arith.constant 0 : index
    %c2 = arith.constant 2 : index
    %31 = vector.load %arg5[%c0_20, %c2] : memref<128x8xf32, #tpu.memory_space<vmem>>, vector<128x1xf32>
    %32 = vector.broadcast %31 : vector<128x1xf32> to vector<128x128xf32>
    %33 = arith.addf %30, %32 : vector<128x128xf32>
    %cst_21 = arith.constant 0.000000e+00 : f32
    %34 = vector.broadcast %cst_21 : f32 to vector<128x128xf32>
    %35 = arith.maximumf %33, %34 : vector<128x128xf32>
    %c256 = arith.constant 256 : index
    %c0_22 = arith.constant 0 : index
    %36 = vector.load %arg4[%c256, %c0_22] : memref<456x128xbf16, #tpu.memory_space<vmem>>, vector<64x128xbf16>
    %37 = arith.truncf %35 : vector<128x128xf32> to vector<128x128xbf16>
    %cst_23 = arith.constant dense<0.000000e+00> : vector<64x128xf32>
    %38 = tpu.matmul %36, %37, %cst_23 {dimension_numbers = #tpu.dot_dimension_numbers<[1], [0], [0], [1], [0, 0, 1, 1], [], []>} : vector<64x128xbf16>, vector<128x128xbf16>, vector<64x128xf32> -> vector<64x128xf32>
    %c0_24 = arith.constant 0 : index
    %c3 = arith.constant 3 : index
    %39 = vector.load %arg5[%c0_24, %c3] : memref<128x8xf32, #tpu.memory_space<vmem>>, vector<64x1xf32>
    %40 = vector.broadcast %39 : vector<64x1xf32> to vector<64x128xf32>
    %41 = arith.addf %38, %40 : vector<64x128xf32>
    %cst_25 = arith.constant 0.000000e+00 : f32
    %42 = vector.broadcast %cst_25 : f32 to vector<64x128xf32>
    %43 = arith.maximumf %41, %42 : vector<64x128xf32>
    %c320 = arith.constant 320 : index
    %c0_26 = arith.constant 0 : index
    %44 = vector.load %arg4[%c320, %c0_26] : memref<456x128xbf16, #tpu.memory_space<vmem>>, vector<64x64xbf16>
    %45 = arith.truncf %43 : vector<64x128xf32> to vector<64x128xbf16>
    %cst_27 = arith.constant dense<0.000000e+00> : vector<64x128xf32>
    %46 = tpu.matmul %44, %45, %cst_27 {dimension_numbers = #tpu.dot_dimension_numbers<[1], [0], [0], [1], [0, 0, 1, 1], [], []>} : vector<64x64xbf16>, vector<64x128xbf16>, vector<64x128xf32> -> vector<64x128xf32>
    %47 = arith.addf %46, %28 : vector<64x128xf32>
    %cst_28 = arith.constant 0.000000e+00 : f32
    %48 = vector.broadcast %cst_28 : f32 to vector<64x128xf32>
    %49 = arith.maximumf %47, %48 : vector<64x128xf32>
    %c448 = arith.constant 448 : index
    %c0_29 = arith.constant 0 : index
    %50 = vector.load %arg4[%c448, %c0_29] : memref<456x128xbf16, #tpu.memory_space<vmem>>, vector<1x64xbf16>
    %51 = arith.truncf %49 : vector<64x128xf32> to vector<64x128xbf16>
    %cst_30 = arith.constant dense<0.000000e+00> : vector<1x128xf32>
    %52 = tpu.matmul %50, %51, %cst_30 {dimension_numbers = #tpu.dot_dimension_numbers<[1], [0], [0], [1], [0, 0, 1, 1], [], []>} : vector<1x64xbf16>, vector<64x128xbf16>, vector<1x128xf32> -> vector<1x128xf32>
    %c0_31 = arith.constant 0 : index
    %c5 = arith.constant 5 : index
    %53 = vector.load %arg5[%c0_31, %c5] : memref<128x8xf32, #tpu.memory_space<vmem>>, vector<1x1xf32>
    %54 = vector.broadcast %53 : vector<1x1xf32> to vector<1x128xf32>
    %55 = arith.addf %52, %54 : vector<1x128xf32>
    %c0_32 = arith.constant 0 : index
    %c0_33 = arith.constant 0 : index
    %56 = vector.load %arg6[%c0_32, %c0_33] : memref<1x128xf32, #tpu.memory_space<vmem>>, vector<1x128xf32>
    tpu.vector_store %arg6[%c0_32, %c0_33], %55 {strides = array<i32>} : memref<1x128xf32, #tpu.memory_space<vmem>>, vector<1x128xf32>,
    return
  }
  func.func @transform_0(%arg0: i32) -> (i32, i32) {
    %c0_i32 = arith.constant 0 : i32
    %c0_i32_0 = arith.constant 0 : i32
    %c0_i32_1 = arith.constant 0 : i32
    return %c0_i32, %c0_i32_0 : i32, i32
  }
  func.func @transform_1(%arg0: i32) -> (i32, i32) {
    %c0_i32 = arith.constant 0 : i32
    %c0_i32_0 = arith.constant 0 : i32
    return %c0_i32, %arg0 : i32, i32
  }
  func.func @transform_2(%arg0: i32) -> (i32, i32) {
    %c0_i32 = arith.constant 0 : i32
    %c0_i32_0 = arith.constant 0 : i32
    return %c0_i32, %arg0 : i32, i32
  }
  func.func @transform_3(%arg0: i32) -> (i32, i32) {
    %c0_i32 = arith.constant 0 : i32
    %c0_i32_0 = arith.constant 0 : i32
    %c0_i32_1 = arith.constant 0 : i32
    return %c0_i32, %c0_i32_0 : i32, i32
  }
  func.func @transform_4(%arg0: i32) -> (i32, i32) {
    %c0_i32 = arith.constant 0 : i32
    %c0_i32_0 = arith.constant 0 : i32
    %c0_i32_1 = arith.constant 0 : i32
    return %c0_i32, %c0_i32_0 : i32, i32
  }
  func.func @transform_5(%arg0: i32) -> (i32, i32) {
    %c0_i32 = arith.constant 0 : i32
    %c0_i32_0 = arith.constant 0 : i32
    return %c0_i32, %arg0 : i32, i32
  }
}

</mosaic_0001>

<llo_original>
// kernel: tpu_custom_call.1
$region0: #{tpu_custom_call.1}
  #allocation0 [shape = 'u32[]', space=smem, size = 0x4, offset = 0x4, fixed_abs, tag = 'smem constant byte address 0x4 - core index']
  #allocation1 [shape = 'u32[144,128]{1,0:T(1,128)}', space=vmem, size = 0x12000, scoped, tag = 'internal scratch']
  %s0 = inlined_call_operand.vmem [shape: f32[8,2], index: 0, kind: input, shape index: {}]
  %s1 = inlined_call_operand.vmem [shape: f32[4,128], index: 1, kind: input, shape index: {}]
  %s2 = inlined_call_operand.vmem [shape: f32[2,128], index: 2, kind: input, shape index: {}]
  %s3 = inlined_call_operand.hbm [shape: bf16[456,128], index: 3, kind: input, shape index: {}]
  %s4 = inlined_call_operand.vmem [shape: f32[128,8], index: 4, kind: input, shape index: {}]
  %s5 = inlined_call_operand.hbm [shape: f32[1,128], index: 5, kind: output, shape index: {}]
  %s6 = sld [smem:[#allocation0]]
  $region34: #{tpu_custom_call.1} parent=0
    _
  %s8 = ssub.s32 1, %s6
  %s9 = scalar_select 0, %s8, %s6
  $region1: #{tpu_custom_call.1} parent=0
    #allocation2 [shape = 'u8[116736]{0}', space=vmem, size = 0x1c800, scoped, tag = 'input window, operand 3, single buffered']
    #allocation3 [shape = 's32[1]{0}', space=sflag, size = 0x4, scoped, tag = 'scoped memory for tpu_custom_call.1']
    #allocation4 [shape = 's32[1]{0}', space=sflag, size = 0x4, scoped, tag = 'scoped memory for tpu_custom_call.1']
    #allocation5 [shape = 'u8[512]{0}', space=vmem, size = 0x400, scoped, tag = 'output window, operand 0, single buffered']
    %10 = vsyncpa [#allocation3], 0
    %11 = vsyncpa [#allocation4], 0
    // Predicated region
    $region2: #{tpu_custom_call.1} parent=1 // pred_check
      _
    $region3: #{tpu_custom_call.1} parent=1 // pred_check_branch
      %13 = sbr.rel (0) target = $region5
    $region4: #{tpu_custom_call.1} parent=1 // pred_region
      _
    $region5: #{tpu_custom_call.1} parent=1 // pred_fallthru
      _
    // Predicated region
    $region6: #{tpu_custom_call.1} parent=1 // pred_check
      _
    $region7: #{tpu_custom_call.1} parent=1 // pred_check_branch
      %15 = sbr.rel (0) target = $region9
    $region8: #{tpu_custom_call.1} parent=1 // pred_region
      _
    $region9: #{tpu_custom_call.1} parent=1 // pred_fallthru
      _
    // Predicated region
    $region10: #{tpu_custom_call.1} parent=1 // pred_check
      _
    $region11: #{tpu_custom_call.1} parent=1 // pred_check_branch
      %17 = sbr.rel (0) target = $region13
    $region12: #{tpu_custom_call.1} parent=1 // pred_region
      _
    $region13: #{tpu_custom_call.1} parent=1 // pred_fallthru
      _
    // Predicated region
    $region14: #{tpu_custom_call.1} parent=1 // pred_check
      _
    $region15: #{tpu_custom_call.1} parent=1 // pred_check_branch
      %19 = sbr.rel (0) target = $region17
    $region16: #{tpu_custom_call.1} parent=1 // pred_region
      %s21 = ssub.s32 3648, 3648
      %22 = vsyncadd [#allocation3], %s21
      %s23 = sshll.u32 [#allocation2], 4
      %s24 = int_to_ptr.vmem [resolvable:$true] %s23
      %29 = dma.hbm_to_vmem [thread:$0]  %s3, 3648, %s24, [#allocation3], 64, 64, 4
    $region17: #{tpu_custom_call.1} parent=1 // pred_fallthru
      _
    // Predicated region
    $region18: #{tpu_custom_call.1} parent=1 // pred_check
      _
    $region19: #{tpu_custom_call.1} parent=1 // pred_check_branch
      %31 = sbr.rel (0) target = $region21
    $region20: #{tpu_custom_call.1} parent=1 // pred_region
      _
    $region21: #{tpu_custom_call.1} parent=1 // pred_fallthru
      _
    // Predicated region
    $region22: #{tpu_custom_call.1} parent=1 // pred_check
      _
    $region23: #{tpu_custom_call.1} parent=1 // pred_check_branch
      %33 = sbr.rel (0) target = $region25
    $region24: #{tpu_custom_call.1} parent=1 // pred_region
      %34 = dma.done [#allocation3], 3648
    $region25: #{tpu_custom_call.1} parent=1 // pred_fallthru
      _
    %v36 = vld [vmem:[%s0] sm:$0xff]
    %v37 = vpack.c.bf16 %v36, %v36
    %v38 = vld [vmem:[%s1] sm:$0xf]
    %v39 = vpack.c.bf16 %v38, %v38
    %v40 = vld [vmem:[%s2] sm:$0x3]
    %v41 = vpack.c.bf16 %v40, %v40
    %v42 = vld [vmem:[#allocation2] sm:$0xf]
    %v43 = vld [vmem:[#allocation2 + $0x4] sm:$0xf]
    %v44 = vld [vmem:[#allocation2 + $0x8] sm:$0xf]
    %v45 = vld [vmem:[#allocation2 + $0xc] sm:$0xf]
    %v46 = vld [vmem:[#allocation2 + $0x10] sm:$0xf]
    %v47 = vld [vmem:[#allocation2 + $0x14] sm:$0xf]
    %v48 = vld [vmem:[#allocation2 + $0x18] sm:$0xf]
    %v49 = vld [vmem:[#allocation2 + $0x1c] sm:$0xf]
    %v50 = vld [vmem:[%s4] sm:$0xff]
    %v51 = vld [vmem:[%s4 + $0x8] sm:$0xff]
    %v52 = vld [vmem:[%s4 + $0x10] sm:$0xff]
    %v53 = vld [vmem:[%s4 + $0x18] sm:$0xff]
    %v54 = vld [vmem:[%s4 + $0x20] sm:$0xff]
    %v55 = vld [vmem:[%s4 + $0x28] sm:$0xff]
    %v56 = vld [vmem:[%s4 + $0x30] sm:$0xff]
    %v57 = vld [vmem:[%s4 + $0x38] sm:$0xff]
    %59 = vset.pattern.permute.xlu0 0
    %60 = vperm.xlu0 %59, %v50
    %v61 = vpop.permute.xlu0 %60
    %64 = vset.pattern.permute.xlu0 0
    %65 = vperm.xlu0 %64, %v51
    %v66 = vpop.permute.xlu0 %65
    %69 = vset.pattern.permute.xlu0 0
    %70 = vperm.xlu0 %69, %v52
    %v71 = vpop.permute.xlu0 %70
    %74 = vset.pattern.permute.xlu0 0
    %75 = vperm.xlu0 %74, %v53
    %v76 = vpop.permute.xlu0 %75
    %79 = vset.pattern.permute.xlu0 0
    %80 = vperm.xlu0 %79, %v54
    %v81 = vpop.permute.xlu0 %80
    %84 = vset.pattern.permute.xlu0 0
    %85 = vperm.xlu0 %84, %v55
    %v86 = vpop.permute.xlu0 %85
    %89 = vset.pattern.permute.xlu0 0
    %90 = vperm.xlu0 %89, %v56
    %v91 = vpop.permute.xlu0 %90
    %94 = vset.pattern.permute.xlu0 0
    %95 = vperm.xlu0 %94, %v57
    %v96 = vpop.permute.xlu0 %95
    %v106 = vunpack.c.l.b16 %v42
    %v107 = vunpack.c.l.b16 %v43
    %v108 = vunpack.c.l.b16 %v44
    %v109 = vunpack.c.l.b16 %v45
    %v110 = vunpack.c.l.b16 %v46
    %v111 = vunpack.c.l.b16 %v47
    %v112 = vunpack.c.l.b16 %v48
    %v113 = vunpack.c.l.b16 %v49
    %v114 = vpack.c.b16 %v107, %v106
    %v115 = vpack.c.b16 %v109, %v108
    %v116 = vpack.c.b16 %v111, %v110
    %v117 = vpack.c.b16 %v113, %v112
    %vm118 = vcmask 64512
    %v120 = vsel %vm118, %v114, 0
    %v123 = vsel %vm118, %v115, 0
    %v126 = vsel %vm118, %v116, 0
    %v129 = vsel %vm118, %v117, 0
    %vm131 = vcmask 1043456
    %v133 = vsel %vm131, %v37, 0
    %135 = vmatprep.subr.bf16.mxu0 0
    %136 = vmatpush1.bf16.msra.mxu0 %v133
    %137 = vmatprep.subr.bf16.mxu0 0
    %138 = vmatpush1.bf16.msra.mxu0 0
    %139 = vmatprep.subr.bf16.mxu0 0
    %140 = vmatpush1.bf16.msra.mxu0 0
    %141 = vmatprep.subr.bf16.mxu0 0
    %142 = vmatpush1.bf16.msra.mxu0 0
    %143 = vmatprep.subr.bf16.mxu0 0
    %144 = vmatpush1.bf16.msra.mxu0 0
    %145 = vmatprep.subr.bf16.mxu0 0
    %146 = vmatpush1.bf16.msra.mxu0 0
    %147 = vmatprep.subr.bf16.mxu0 0
    %148 = vmatpush1.bf16.msra.mxu0 0
    %149 = vmatprep.subr.bf16.mxu0 0
    %150 = vmatpush1.bf16.msra.mxu0 0
    %151 = vmatprep.subr.bf16.mxu0 0
    %152 = vmatpush1.bf16.msra.mxu0 0
    %153 = vmatprep.subr.bf16.mxu0 0
    %154 = vmatpush1.bf16.msra.mxu0 0
    %155 = vmatprep.subr.bf16.mxu0 0
    %156 = vmatpush1.bf16.msra.mxu0 0
    %157 = vmatprep.subr.bf16.mxu0 0
    %158 = vmatpush1.bf16.msra.mxu0 0
    %159 = vmatprep.subr.bf16.mxu0 0
    %160 = vmatpush1.bf16.msra.mxu0 0
    %161 = vmatprep.subr.bf16.mxu0 0
    %162 = vmatpush1.bf16.msra.mxu0 0
    %163 = vmatprep.subr.bf16.mxu0 0
    %164 = vmatpush1.bf16.msra.mxu0 0
    %165 = vmatprep.subr.bf16.mxu0 0
    %166 = vmatpush1.bf16.msra.mxu0 0
    %167 = vmatprep.mubr.bf16.mxu0 0
    %168 = vmatmul.mubr.bf16.gmra.mrb[0].mxu0 %v120
    %v169 = vpop.f32.mrb[0].mxu0
    %v170 = vadd.f32 %v61, %v169
    %v171 = vpop.f32.mrb[0].mxu0
    %v172 = vpop.f32.mrb[0].mxu0
    %v173 = vadd.f32 %v66, %v172
    %v174 = vpop.f32.mrb[0].mxu0
    %175 = vmatprep.mubr.bf16.mxu0 0
    %176 = vmatmul.mubr.bf16.gmra.mrb[0].mxu0 %v123
    %v177 = vpop.f32.mrb[0].mxu0
    %v178 = vadd.f32 %v71, %v177
    %v179 = vpop.f32.mrb[0].mxu0
    %v180 = vpop.f32.mrb[0].mxu0
    %v181 = vadd.f32 %v76, %v180
    %v182 = vpop.f32.mrb[0].mxu0
    %183 = vmatprep.mubr.bf16.mxu0 0
    %184 = vmatmul.mubr.bf16.gmra.mrb[0].mxu0 %v126
    %v185 = vpop.f32.mrb[0].mxu0
    %v186 = vadd.f32 %v81, %v185
    %v187 = vpop.f32.mrb[0].mxu0
    %v188 = vpop.f32.mrb[0].mxu0
    %v189 = vadd.f32 %v86, %v188
    %v190 = vpop.f32.mrb[0].mxu0
    %191 = vmatprep.mubr.bf16.mxu0 0
    %192 = vmatmul.mubr.bf16.gmra.mrb[0].mxu0 %v129
    %v193 = vpop.f32.mrb[0].mxu0
    %v194 = vadd.f32 %v91, %v193
    %v195 = vpop.f32.mrb[0].mxu0
    %v196 = vpop.f32.mrb[0].mxu0
    %v197 = vadd.f32 %v96, %v196
    %v198 = vpop.f32.mrb[0].mxu0
    %199 = vdwg.mxu0
    %v200 = vmax.f32 %v170, 0.0
    %v201 = vmax.f32 %v173, 0.0
    %v202 = vmax.f32 %v178, 0.0
    %v203 = vmax.f32 %v181, 0.0
    %v204 = vmax.f32 %v186, 0.0
    %v205 = vmax.f32 %v189, 0.0
    %v206 = vmax.f32 %v194, 0.0
    %v207 = vmax.f32 %v197, 0.0
    %v208 = vld [vmem:[#allocation2 + $0x20] sm:$0xf]
    %v209 = vld [vmem:[#allocation2 + $0x24] sm:$0xf]
    %v210 = vld [vmem:[#allocation2 + $0x28] sm:$0xf]
    %v211 = vld [vmem:[#allocation2 + $0x2c] sm:$0xf]
    %v212 = vld [vmem:[#allocation2 + $0x30] sm:$0xf]
    %v213 = vld [vmem:[#allocation2 + $0x34] sm:$0xf]
    %v214 = vld [vmem:[#allocation2 + $0x38] sm:$0xf]
    %v215 = vld [vmem:[#allocation2 + $0x3c] sm:$0xf]
    %v216 = vpack.c.bf16 %v201, %v200
    %v217 = vpack.c.bf16 %v203, %v202
    %v218 = vpack.c.bf16 %v205, %v204
    %v219 = vpack.c.bf16 %v207, %v206
    %220 = vset.pattern.permute.xlu0 1
    %221 = vperm.xlu0 %220, %v50
    %v222 = vpop.permute.xlu0 %221
    %224 = vset.pattern.permute.xlu0 1
    %225 = vperm.xlu0 %224, %v51
    %v226 = vpop.permute.xlu0 %225
    %228 = vset.pattern.permute.xlu0 1
    %229 = vperm.xlu0 %228, %v52
    %v230 = vpop.permute.xlu0 %229
    %232 = vset.pattern.permute.xlu0 1
    %233 = vperm.xlu0 %232, %v53
    %v234 = vpop.permute.xlu0 %233
    %236 = vset.pattern.permute.xlu0 1
    %237 = vperm.xlu0 %236, %v54
    %v238 = vpop.permute.xlu0 %237
    %240 = vset.pattern.permute.xlu0 1
    %241 = vperm.xlu0 %240, %v55
    %v242 = vpop.permute.xlu0 %241
    %244 = vset.pattern.permute.xlu0 1
    %245 = vperm.xlu0 %244, %v56
    %v246 = vpop.permute.xlu0 %245
    %248 = vset.pattern.permute.xlu0 1
    %249 = vperm.xlu0 %248, %v57
    %v250 = vpop.permute.xlu0 %249
    %v260 = vunpack.c.l.b16 %v208
    %v261 = vunpack.c.l.b16 %v209
    %v262 = vunpack.c.l.b16 %v210
    %v263 = vunpack.c.l.b16 %v211
    %v264 = vunpack.c.l.b16 %v212
    %v265 = vunpack.c.l.b16 %v213
    %v266 = vunpack.c.l.b16 %v214
    %v267 = vunpack.c.l.b16 %v215
    %v268 = vpack.c.b16 %v261, %v260
    %v269 = vpack.c.b16 %v263, %v262
    %v270 = vpack.c.b16 %v265, %v264
    %v271 = vpack.c.b16 %v267, %v266
    %vm272 = vcmask 523264
    %v274 = vsel %vm272, %v268, 0
    %v277 = vsel %vm272, %v269, 0
    %v280 = vsel %vm272, %v270, 0
    %v283 = vsel %vm272, %v271, 0
    %285 = vmatprep.subr.bf16.mxu0 0
    %286 = vmatpush1.bf16.msra.mxu0 %v216
    %287 = vmatprep.subr.bf16.mxu0 0
    %288 = vmatpush1.bf16.msra.mxu0 %v217
    %289 = vmatprep.subr.bf16.mxu0 0
    %290 = vmatpush1.bf16.msra.mxu0 %v218
    %291 = vmatprep.subr.bf16.mxu0 0
    %292 = vmatpush1.bf16.msra.mxu0 %v219
    %293 = vmatprep.subr.bf16.mxu0 0
    %294 = vmatpush1.bf16.msra.mxu0 0
    %295 = vmatprep.subr.bf16.mxu0 0
    %296 = vmatpush1.bf16.msra.mxu0 0
    %297 = vmatprep.subr.bf16.mxu0 0
    %298 = vmatpush1.bf16.msra.mxu0 0
    %299 = vmatprep.subr.bf16.mxu0 0
    %300 = vmatpush1.bf16.msra.mxu0 0
    %301 = vmatprep.subr.bf16.mxu0 0
    %302 = vmatpush1.bf16.msra.mxu0 0
    %303 = vmatprep.subr.bf16.mxu0 0
    %304 = vmatpush1.bf16.msra.mxu0 0
    %305 = vmatprep.subr.bf16.mxu0 0
    %306 = vmatpush1.bf16.msra.mxu0 0
    %307 = vmatprep.subr.bf16.mxu0 0
    %308 = vmatpush1.bf16.msra.mxu0 0
    %309 = vmatprep.subr.bf16.mxu0 0
    %310 = vmatpush1.bf16.msra.mxu0 0
    %311 = vmatprep.subr.bf16.mxu0 0
    %312 = vmatpush1.bf16.msra.mxu0 0
    %313 = vmatprep.subr.bf16.mxu0 0
    %314 = vmatpush1.bf16.msra.mxu0 0
    %315 = vmatprep.subr.bf16.mxu0 0
    %316 = vmatpush1.bf16.msra.mxu0 0
    %317 = vmatprep.mubr.bf16.mxu0 0
    %318 = vmatmul.mubr.bf16.gmra.mrb[0].mxu0 %v274
    %v319 = vpop.f32.mrb[0].mxu0
    %v320 = vadd.f32 %v222, %v319
    %v321 = vpop.f32.mrb[0].mxu0
    %v322 = vpop.f32.mrb[0].mxu0
    %v323 = vadd.f32 %v226, %v322
    %v324 = vpop.f32.mrb[0].mxu0
    %325 = vmatprep.mubr.bf16.mxu0 0
    %326 = vmatmul.mubr.bf16.gmra.mrb[0].mxu0 %v277
    %v327 = vpop.f32.mrb[0].mxu0
    %v328 = vadd.f32 %v230, %v327
    %v329 = vpop.f32.mrb[0].mxu0
    %v330 = vpop.f32.mrb[0].mxu0
    %v331 = vadd.f32 %v234, %v330
    %v332 = vpop.f32.mrb[0].mxu0
    %333 = vmatprep.mubr.bf16.mxu0 0
    %334 = vmatmul.mubr.bf16.gmra.mrb[0].mxu0 %v280
    %v335 = vpop.f32.mrb[0].mxu0
    %v336 = vadd.f32 %v238, %v335
    %v337 = vpop.f32.mrb[0].mxu0
    %v338 = vpop.f32.mrb[0].mxu0
    %v339 = vadd.f32 %v242, %v338
    %v340 = vpop.f32.mrb[0].mxu0
    %341 = vmatprep.mubr.bf16.mxu0 0
    %342 = vmatmul.mubr.bf16.gmra.mrb[0].mxu0 %v283
    %v343 = vpop.f32.mrb[0].mxu0
    %v344 = vadd.f32 %v246, %v343
    %v345 = vpop.f32.mrb[0].mxu0
    %v346 = vpop.f32.mrb[0].mxu0
    %v347 = vadd.f32 %v250, %v346
    %v348 = vpop.f32.mrb[0].mxu0
    %349 = vdwg.mxu0
    %v350 = vmax.f32 %v320, 0.0
    %v351 = vmax.f32 %v323, 0.0
    %v352 = vmax.f32 %v328, 0.0
    %v353 = vmax.f32 %v331, 0.0
    %v354 = vmax.f32 %v336, 0.0
    %v355 = vmax.f32 %v339, 0.0
    %v356 = vmax.f32 %v344, 0.0
    %v357 = vmax.f32 %v347, 0.0
    %v358 = vld [vmem:[#allocation2 + $0xc0] sm:$0xf]
    %v359 = vld [vmem:[#allocation2 + $0xc4] sm:$0xf]
    %v360 = vld [vmem:[#allocation2 + $0xc8] sm:$0xf]
    %v361 = vld [vmem:[#allocation2 + $0xcc] sm:$0xf]
    %v362 = vld [vmem:[#allocation2 + $0xd0] sm:$0xf]
    %v363 = vld [vmem:[#allocation2 + $0xd4] sm:$0xf]
    %v364 = vld [vmem:[#allocation2 + $0xd8] sm:$0xf]
    %v365 = vld [vmem:[#allocation2 + $0xdc] sm:$0xf]
    %v366 = vpack.c.bf16 %v351, %v350
    %v367 = vpack.c.bf16 %v353, %v352
    %v368 = vpack.c.bf16 %v355, %v354
    %v369 = vpack.c.bf16 %v357, %v356
    %370 = vset.pattern.permute.xlu0 4
    %371 = vperm.xlu0 %370, %v50
    %v372 = vpop.permute.xlu0 %371
    %374 = vset.pattern.permute.xlu0 4
    %375 = vperm.xlu0 %374, %v51
    %v376 = vpop.permute.xlu0 %375
    %378 = vset.pattern.permute.xlu0 4
    %379 = vperm.xlu0 %378, %v52
    %v380 = vpop.permute.xlu0 %379
    %382 = vset.pattern.permute.xlu0 4
    %383 = vperm.xlu0 %382, %v53
    %v384 = vpop.permute.xlu0 %383
    %386 = vset.pattern.permute.xlu0 4
    %387 = vperm.xlu0 %386, %v54
    %v388 = vpop.permute.xlu0 %387
    %390 = vset.pattern.permute.xlu0 4
    %391 = vperm.xlu0 %390, %v55
    %v392 = vpop.permute.xlu0 %391
    %394 = vset.pattern.permute.xlu0 4
    %395 = vperm.xlu0 %394, %v56
    %v396 = vpop.permute.xlu0 %395
    %398 = vset.pattern.permute.xlu0 4
    %399 = vperm.xlu0 %398, %v57
    %v400 = vpop.permute.xlu0 %399
    %v410 = vunpack.c.l.b16 %v358
    %v411 = vunpack.c.l.b16 %v359
    %v412 = vunpack.c.l.b16 %v360
    %v413 = vunpack.c.l.b16 %v361
    %v414 = vunpack.c.l.b16 %v362
    %v415 = vunpack.c.l.b16 %v363
    %v416 = vunpack.c.l.b16 %v364
    %v417 = vunpack.c.l.b16 %v365
    %v418 = vpack.c.b16 %v411, %v410
    %v419 = vpack.c.b16 %v413, %v412
    %v420 = vpack.c.b16 %v415, %v414
    %v421 = vpack.c.b16 %v417, %v416
    %v423 = vsel %vm272, %v418, 0
    %v426 = vsel %vm272, %v419, 0
    %v429 = vsel %vm272, %v420, 0
    %v432 = vsel %vm272, %v421, 0
    %434 = vmatprep.subr.bf16.mxu0 0
    %435 = vmatpush1.bf16.msra.mxu0 %v366
    %436 = vmatprep.subr.bf16.mxu0 0
    %437 = vmatpush1.bf16.msra.mxu0 %v367
    %438 = vmatprep.subr.bf16.mxu0 0
    %439 = vmatpush1.bf16.msra.mxu0 %v368
    %440 = vmatprep.subr.bf16.mxu0 0
    %441 = vmatpush1.bf16.msra.mxu0 %v369
    %442 = vmatprep.subr.bf16.mxu0 0
    %443 = vmatpush1.bf16.msra.mxu0 0
    %444 = vmatprep.subr.bf16.mxu0 0
    %445 = vmatpush1.bf16.msra.mxu0 0
    %446 = vmatprep.subr.bf16.mxu0 0
    %447 = vmatpush1.bf16.msra.mxu0 0
    %448 = vmatprep.subr.bf16.mxu0 0
    %449 = vmatpush1.bf16.msra.mxu0 0
    %450 = vmatprep.subr.bf16.mxu0 0
    %451 = vmatpush1.bf16.msra.mxu0 0
    %452 = vmatprep.subr.bf16.mxu0 0
    %453 = vmatpush1.bf16.msra.mxu0 0
    %454 = vmatprep.subr.bf16.mxu0 0
    %455 = vmatpush1.bf16.msra.mxu0 0
    %456 = vmatprep.subr.bf16.mxu0 0
    %457 = vmatpush1.bf16.msra.mxu0 0
    %458 = vmatprep.subr.bf16.mxu0 0
    %459 = vmatpush1.bf16.msra.mxu0 0
    %460 = vmatprep.subr.bf16.mxu0 0
    %461 = vmatpush1.bf16.msra.mxu0 0
    %462 = vmatprep.subr.bf16.mxu0 0
    %463 = vmatpush1.bf16.msra.mxu0 0
    %464 = vmatprep.subr.bf16.mxu0 0
    %465 = vmatpush1.bf16.msra.mxu0 0
    %466 = vmatprep.mubr.bf16.mxu0 0
    %467 = vmatmul.mubr.bf16.gmra.mrb[0].mxu0 %v423
    %v468 = vpop.f32.mrb[0].mxu0
    %v469 = vadd.f32 %v372, %v468
    %v470 = vpop.f32.mrb[0].mxu0
    %v471 = vpop.f32.mrb[0].mxu0
    %v472 = vadd.f32 %v376, %v471
    %v473 = vpop.f32.mrb[0].mxu0
    %474 = vmatprep.mubr.bf16.mxu0 0
    %475 = vmatmul.mubr.bf16.gmra.mrb[0].mxu0 %v426
    %v476 = vpop.f32.mrb[0].mxu0
    %v477 = vadd.f32 %v380, %v476
    %v478 = vpop.f32.mrb[0].mxu0
    %v479 = vpop.f32.mrb[0].mxu0
    %v480 = vadd.f32 %v384, %v479
    %v481 = vpop.f32.mrb[0].mxu0
    %482 = vmatprep.mubr.bf16.mxu0 0
    %483 = vmatmul.mubr.bf16.gmra.mrb[0].mxu0 %v429
    %v484 = vpop.f32.mrb[0].mxu0
    %v485 = vadd.f32 %v388, %v484
    %v486 = vpop.f32.mrb[0].mxu0
    %v487 = vpop.f32.mrb[0].mxu0
    %v488 = vadd.f32 %v392, %v487
    %v489 = vpop.f32.mrb[0].mxu0
    %490 = vmatprep.mubr.bf16.mxu0 0
    %491 = vmatmul.mubr.bf16.gmra.mrb[0].mxu0 %v432
    %v492 = vpop.f32.mrb[0].mxu0
    %v493 = vadd.f32 %v396, %v492
    %v494 = vpop.f32.mrb[0].mxu0
    %v495 = vpop.f32.mrb[0].mxu0
    %v496 = vadd.f32 %v400, %v495
    %v497 = vpop.f32.mrb[0].mxu0
    %498 = vdwg.mxu0
    %v499 = vpack.c.bf16 %v472, %v469
    %v500 = vpack.c.bf16 %v480, %v477
    %v501 = vpack.c.bf16 %v488, %v485
    %v502 = vpack.c.bf16 %v496, %v493
    %vm503 = vcmask 15360
    %v505 = vsel %vm503, %v499, 0
    %v508 = vsel %vm503, %v500, 0
    %v511 = vsel %vm503, %v501, 0
    %v514 = vsel %vm503, %v502, 0
    %vm516 = vcmask 1040384
    %v518 = vsel %vm516, %v41, 0
    %520 = vmatprep.subr.bf16.mxu0 0
    %521 = vmatpush1.bf16.msra.mxu0 %v518
    %522 = vmatprep.subr.bf16.mxu0 0
    %523 = vmatpush1.bf16.msra.mxu0 0
    %524 = vmatprep.subr.bf16.mxu0 0
    %525 = vmatpush1.bf16.msra.mxu0 0
    %526 = vmatprep.subr.bf16.mxu0 0
    %527 = vmatpush1.bf16.msra.mxu0 0
    %528 = vmatprep.subr.bf16.mxu0 0
    %529 = vmatpush1.bf16.msra.mxu0 0
    %530 = vmatprep.subr.bf16.mxu0 0
    %531 = vmatpush1.bf16.msra.mxu0 0
    %532 = vmatprep.subr.bf16.mxu0 0
    %533 = vmatpush1.bf16.msra.mxu0 0
    %534 = vmatprep.subr.bf16.mxu0 0
    %535 = vmatpush1.bf16.msra.mxu0 0
    %536 = vmatprep.subr.bf16.mxu0 0
    %537 = vmatpush1.bf16.msra.mxu0 0
    %538 = vmatprep.subr.bf16.mxu0 0
    %539 = vmatpush1.bf16.msra.mxu0 0
    %540 = vmatprep.subr.bf16.mxu0 0
    %541 = vmatpush1.bf16.msra.mxu0 0
    %542 = vmatprep.subr.bf16.mxu0 0
    %543 = vmatpush1.bf16.msra.mxu0 0
    %544 = vmatprep.subr.bf16.mxu0 0
    %545 = vmatpush1.bf16.msra.mxu0 0
    %546 = vmatprep.subr.bf16.mxu0 0
    %547 = vmatpush1.bf16.msra.mxu0 0
    %548 = vmatprep.subr.bf16.mxu0 0
    %549 = vmatpush1.bf16.msra.mxu0 0
    %550 = vmatprep.subr.bf16.mxu0 0
    %551 = vmatpush1.bf16.msra.mxu0 0
    %552 = vmatprep.mubr.bf16.mxu0 0
    %553 = vmatmul.mubr.bf16.gmra.mrb[0].mxu0 %v505
    %v554 = vpop.f32.mrb[0].mxu0
    %v555 = vadd.f32 0.0, %v554
    %v556 = vpop.f32.mrb[0].mxu0
    %v557 = vpop.f32.mrb[0].mxu0
    %v558 = vadd.f32 0.0, %v557
    %v559 = vpop.f32.mrb[0].mxu0
    %560 = vmatprep.mubr.bf16.mxu0 0
    %561 = vmatmul.mubr.bf16.gmra.mrb[0].mxu0 %v508
    %v562 = vpop.f32.mrb[0].mxu0
    %v563 = vadd.f32 0.0, %v562
    %v564 = vpop.f32.mrb[0].mxu0
    %v565 = vpop.f32.mrb[0].mxu0
    %v566 = vadd.f32 0.0, %v565
    %v567 = vpop.f32.mrb[0].mxu0
    %568 = vmatprep.mubr.bf16.mxu0 0
    %569 = vmatmul.mubr.bf16.gmra.mrb[0].mxu0 %v511
    %v570 = vpop.f32.mrb[0].mxu0
    %v571 = vadd.f32 0.0, %v570
    %v572 = vpop.f32.mrb[0].mxu0
    %v573 = vpop.f32.mrb[0].mxu0
    %v574 = vadd.f32 0.0, %v573
    %v575 = vpop.f32.mrb[0].mxu0
    %576 = vmatprep.mubr.bf16.mxu0 0
    %577 = vmatmul.mubr.bf16.gmra.mrb[0].mxu0 %v514
    %v578 = vpop.f32.mrb[0].mxu0
    %v579 = vadd.f32 0.0, %v578
    %v580 = vpop.f32.mrb[0].mxu0
    %v581 = vpop.f32.mrb[0].mxu0
    %v582 = vadd.f32 0.0, %v581
    %v583 = vpop.f32.mrb[0].mxu0
    %584 = vdwg.mxu0
    %v585 = vld [vmem:[#allocation2 + $0x40] sm:$0xf]
    %v586 = vld [vmem:[#allocation2 + $0x44] sm:$0xf]
    %v587 = vld [vmem:[#allocation2 + $0x48] sm:$0xf]
    %v588 = vld [vmem:[#allocation2 + $0x4c] sm:$0xf]
    %v589 = vld [vmem:[#allocation2 + $0x50] sm:$0xf]
    %v590 = vld [vmem:[#allocation2 + $0x54] sm:$0xf]
    %v591 = vld [vmem:[#allocation2 + $0x58] sm:$0xf]
    %v592 = vld [vmem:[#allocation2 + $0x5c] sm:$0xf]
    %v593 = vld [vmem:[#allocation2 + $0x60] sm:$0xf]
    %v594 = vld [vmem:[#allocation2 + $0x64] sm:$0xf]
    %v595 = vld [vmem:[#allocation2 + $0x68] sm:$0xf]
    %v596 = vld [vmem:[#allocation2 + $0x6c] sm:$0xf]
    %v597 = vld [vmem:[#allocation2 + $0x70] sm:$0xf]
    %v598 = vld [vmem:[#allocation2 + $0x74] sm:$0xf]
    %v599 = vld [vmem:[#allocation2 + $0x78] sm:$0xf]
    %v600 = vld [vmem:[#allocation2 + $0x7c] sm:$0xf]
    %v601 = vld [vmem:[%s4] sm:$0xff]
    %v602 = vld [vmem:[%s4 + $0x8] sm:$0xff]
    %v603 = vld [vmem:[%s4 + $0x10] sm:$0xff]
    %v604 = vld [vmem:[%s4 + $0x18] sm:$0xff]
    %v605 = vld [vmem:[%s4 + $0x20] sm:$0xff]
    %v606 = vld [vmem:[%s4 + $0x28] sm:$0xff]
    %v607 = vld [vmem:[%s4 + $0x30] sm:$0xff]
    %v608 = vld [vmem:[%s4 + $0x38] sm:$0xff]
    %v609 = vld [vmem:[%s4 + $0x40] sm:$0xff]
    %v610 = vld [vmem:[%s4 + $0x48] sm:$0xff]
    %v611 = vld [vmem:[%s4 + $0x50] sm:$0xff]
    %v612 = vld [vmem:[%s4 + $0x58] sm:$0xff]
    %v613 = vld [vmem:[%s4 + $0x60] sm:$0xff]
    %v614 = vld [vmem:[%s4 + $0x68] sm:$0xff]
    %v615 = vld [vmem:[%s4 + $0x70] sm:$0xff]
    %v616 = vld [vmem:[%s4 + $0x78] sm:$0xff]
    %618 = vset.pattern.permute.xlu0 2
    %619 = vperm.xlu0 %618, %v601
    %v620 = vpop.permute.xlu0 %619
    %623 = vset.pattern.permute.xlu0 2
    %624 = vperm.xlu0 %623, %v602
    %v625 = vpop.permute.xlu0 %624
    %628 = vset.pattern.permute.xlu0 2
    %629 = vperm.xlu0 %628, %v603
    %v630 = vpop.permute.xlu0 %629
    %633 = vset.pattern.permute.xlu0 2
    %634 = vperm.xlu0 %633, %v604
    %v635 = vpop.permute.xlu0 %634
    %638 = vset.pattern.permute.xlu0 2
    %639 = vperm.xlu0 %638, %v605
    %v640 = vpop.permute.xlu0 %639
    %643 = vset.pattern.permute.xlu0 2
    %644 = vperm.xlu0 %643, %v606
    %v645 = vpop.permute.xlu0 %644
    %648 = vset.pattern.permute.xlu0 2
    %649 = vperm.xlu0 %648, %v607
    %v650 = vpop.permute.xlu0 %649
    %653 = vset.pattern.permute.xlu0 2
    %654 = vperm.xlu0 %653, %v608
    %v655 = vpop.permute.xlu0 %654
    %658 = vset.pattern.permute.xlu0 2
    %659 = vperm.xlu0 %658, %v609
    %v660 = vpop.permute.xlu0 %659
    %663 = vset.pattern.permute.xlu0 2
    %664 = vperm.xlu0 %663, %v610
    %v665 = vpop.permute.xlu0 %664
    %668 = vset.pattern.permute.xlu0 2
    %669 = vperm.xlu0 %668, %v611
    %v670 = vpop.permute.xlu0 %669
    %673 = vset.pattern.permute.xlu0 2
    %674 = vperm.xlu0 %673, %v612
    %v675 = vpop.permute.xlu0 %674
    %678 = vset.pattern.permute.xlu0 2
    %679 = vperm.xlu0 %678, %v613
    %v680 = vpop.permute.xlu0 %679
    %683 = vset.pattern.permute.xlu0 2
    %684 = vperm.xlu0 %683, %v614
    %v685 = vpop.permute.xlu0 %684
    %688 = vset.pattern.permute.xlu0 2
    %689 = vperm.xlu0 %688, %v615
    %v690 = vpop.permute.xlu0 %689
    %693 = vset.pattern.permute.xlu0 2
    %694 = vperm.xlu0 %693, %v616
    %v695 = vpop.permute.xlu0 %694
    %v713 = vunpack.c.l.b16 %v585
    %v714 = vunpack.c.l.b16 %v586
    %v715 = vunpack.c.l.b16 %v587
    %v716 = vunpack.c.l.b16 %v588
    %v717 = vunpack.c.l.b16 %v589
    %v718 = vunpack.c.l.b16 %v590
    %v719 = vunpack.c.l.b16 %v591
    %v720 = vunpack.c.l.b16 %v592
    %v721 = vunpack.c.l.b16 %v593
    %v722 = vunpack.c.l.b16 %v594
    %v723 = vunpack.c.l.b16 %v595
    %v724 = vunpack.c.l.b16 %v596
    %v725 = vunpack.c.l.b16 %v597
    %v726 = vunpack.c.l.b16 %v598
    %v727 = vunpack.c.l.b16 %v599
    %v728 = vunpack.c.l.b16 %v600
    %v729 = vpack.c.b16 %v714, %v713
    %v730 = vpack.c.b16 %v716, %v715
    %v731 = vpack.c.b16 %v718, %v717
    %v732 = vpack.c.b16 %v720, %v719
    %v733 = vpack.c.b16 %v722, %v721
    %v734 = vpack.c.b16 %v724, %v723
    %v735 = vpack.c.b16 %v726, %v725
    %v736 = vpack.c.b16 %v728, %v727
    %vm737 = vcmask 31744
    %v739 = vsel %vm737, %v729, 0
    %v742 = vsel %vm737, %v730, 0
    %v745 = vsel %vm737, %v731, 0
    %v748 = vsel %vm737, %v732, 0
    %v751 = vsel %vm737, %v733, 0
    %v754 = vsel %vm737, %v734, 0
    %v757 = vsel %vm737, %v735, 0
    %v760 = vsel %vm737, %v736, 0
    %vm762 = vcmask 1041408
    %v764 = vsel %vm762, %v39, 0
    %766 = vmatprep.subr.bf16.mxu0 0
    %767 = vmatpush1.bf16.msra.mxu0 %v764
    %768 = vmatprep.subr.bf16.mxu0 0
    %769 = vmatpush1.bf16.msra.mxu0 0
    %770 = vmatprep.subr.bf16.mxu0 0
    %771 = vmatpush1.bf16.msra.mxu0 0
    %772 = vmatprep.subr.bf16.mxu0 0
    %773 = vmatpush1.bf16.msra.mxu0 0
    %774 = vmatprep.subr.bf16.mxu0 0
    %775 = vmatpush1.bf16.msra.mxu0 0
    %776 = vmatprep.subr.bf16.mxu0 0
    %777 = vmatpush1.bf16.msra.mxu0 0
    %778 = vmatprep.subr.bf16.mxu0 0
    %779 = vmatpush1.bf16.msra.mxu0 0
    %780 = vmatprep.subr.bf16.mxu0 0
    %781 = vmatpush1.bf16.msra.mxu0 0
    %782 = vmatprep.subr.bf16.mxu0 0
    %783 = vmatpush1.bf16.msra.mxu0 0
    %784 = vmatprep.subr.bf16.mxu0 0
    %785 = vmatpush1.bf16.msra.mxu0 0
    %786 = vmatprep.subr.bf16.mxu0 0
    %787 = vmatpush1.bf16.msra.mxu0 0
    %788 = vmatprep.subr.bf16.mxu0 0
    %789 = vmatpush1.bf16.msra.mxu0 0
    %790 = vmatprep.subr.bf16.mxu0 0
    %791 = vmatpush1.bf16.msra.mxu0 0
    %792 = vmatprep.subr.bf16.mxu0 0
    %793 = vmatpush1.bf16.msra.mxu0 0
    %794 = vmatprep.subr.bf16.mxu0 0
    %795 = vmatpush1.bf16.msra.mxu0 0
    %796 = vmatprep.subr.bf16.mxu0 0
    %797 = vmatpush1.bf16.msra.mxu0 0
    %798 = vmatprep.mubr.bf16.mxu0 0
    %799 = vmatmul.mubr.bf16.gmra.mrb[0].mxu0 %v739
    %v800 = vpop.f32.mrb[0].mxu0
    %v801 = vadd.f32 %v620, %v800
    %v802 = vpop.f32.mrb[0].mxu0
    %v803 = vpop.f32.mrb[0].mxu0
    %v804 = vadd.f32 %v625, %v803
    %v805 = vpop.f32.mrb[0].mxu0
    %806 = vmatprep.mubr.bf16.mxu0 0
    %807 = vmatmul.mubr.bf16.gmra.mrb[0].mxu0 %v742
    %v808 = vpop.f32.mrb[0].mxu0
    %v809 = vadd.f32 %v630, %v808
    %v810 = vpop.f32.mrb[0].mxu0
    %v811 = vpop.f32.mrb[0].mxu0
    %v812 = vadd.f32 %v635, %v811
    %v813 = vpop.f32.mrb[0].mxu0
    %814 = vmatprep.mubr.bf16.mxu0 0
    %815 = vmatmul.mubr.bf16.gmra.mrb[0].mxu0 %v745
    %v816 = vpop.f32.mrb[0].mxu0
    %v817 = vadd.f32 %v640, %v816
    %v818 = vpop.f32.mrb[0].mxu0
    %v819 = vpop.f32.mrb[0].mxu0
    %v820 = vadd.f32 %v645, %v819
    %v821 = vpop.f32.mrb[0].mxu0
    %822 = vmatprep.mubr.bf16.mxu0 0
    %823 = vmatmul.mubr.bf16.gmra.mrb[0].mxu0 %v748
    %v824 = vpop.f32.mrb[0].mxu0
    %v825 = vadd.f32 %v650, %v824
    %v826 = vpop.f32.mrb[0].mxu0
    %v827 = vpop.f32.mrb[0].mxu0
    %v828 = vadd.f32 %v655, %v827
    %v829 = vpop.f32.mrb[0].mxu0
    %830 = vmatprep.mubr.bf16.mxu0 0
    %831 = vmatmul.mubr.bf16.gmra.mrb[0].mxu0 %v751
    %v832 = vpop.f32.mrb[0].mxu0
    %v833 = vadd.f32 %v660, %v832
    %v834 = vpop.f32.mrb[0].mxu0
    %v835 = vpop.f32.mrb[0].mxu0
    %v836 = vadd.f32 %v665, %v835
    %v837 = vpop.f32.mrb[0].mxu0
    %838 = vmatprep.mubr.bf16.mxu0 0
    %839 = vmatmul.mubr.bf16.gmra.mrb[0].mxu0 %v754
    %v840 = vpop.f32.mrb[0].mxu0
    %v841 = vadd.f32 %v670, %v840
    %v842 = vpop.f32.mrb[0].mxu0
    %v843 = vpop.f32.mrb[0].mxu0
    %v844 = vadd.f32 %v675, %v843
    %v845 = vpop.f32.mrb[0].mxu0
    %846 = vmatprep.mubr.bf16.mxu0 0
    %847 = vmatmul.mubr.bf16.gmra.mrb[0].mxu0 %v757
    %v848 = vpop.f32.mrb[0].mxu0
    %v849 = vadd.f32 %v680, %v848
    %v850 = vpop.f32.mrb[0].mxu0
    %v851 = vpop.f32.mrb[0].mxu0
    %v852 = vadd.f32 %v685, %v851
    %v853 = vpop.f32.mrb[0].mxu0
    %854 = vmatprep.mubr.bf16.mxu0 0
    %855 = vmatmul.mubr.bf16.gmra.mrb[0].mxu0 %v760
    %v856 = vpop.f32.mrb[0].mxu0
    %v857 = vadd.f32 %v690, %v856
    %v858 = vpop.f32.mrb[0].mxu0
    %v859 = vpop.f32.mrb[0].mxu0
    %v860 = vadd.f32 %v695, %v859
    %v861 = vpop.f32.mrb[0].mxu0
    %862 = vdwg.mxu0
    %v863 = vmax.f32 %v801, 0.0
    %v864 = vmax.f32 %v804, 0.0
    %v865 = vmax.f32 %v809, 0.0
    %v866 = vmax.f32 %v812, 0.0
    %v867 = vmax.f32 %v817, 0.0
    %v868 = vmax.f32 %v820, 0.0
    %v869 = vmax.f32 %v825, 0.0
    %v870 = vmax.f32 %v828, 0.0
    %v871 = vmax.f32 %v833, 0.0
    %v872 = vmax.f32 %v836, 0.0
    %v873 = vmax.f32 %v841, 0.0
    %v874 = vmax.f32 %v844, 0.0
    %v875 = vmax.f32 %v849, 0.0
    %v876 = vmax.f32 %v852, 0.0
    %v877 = vmax.f32 %v857, 0.0
    %v878 = vmax.f32 %v860, 0.0
    %v879 = vld [vmem:[#allocation2 + $0x80] sm:$0xf]
    %v880 = vld [vmem:[#allocation2 + $0x84] sm:$0xf]
    %v881 = vld [vmem:[#allocation2 + $0x88] sm:$0xf]
    %v882 = vld [vmem:[#allocation2 + $0x8c] sm:$0xf]
    %v883 = vld [vmem:[#allocation2 + $0x90] sm:$0xf]
    %v884 = vld [vmem:[#allocation2 + $0x94] sm:$0xf]
    %v885 = vld [vmem:[#allocation2 + $0x98] sm:$0xf]
    %v886 = vld [vmem:[#allocation2 + $0x9c] sm:$0xf]
    %v887 = vpack.c.bf16 %v864, %v863
    %v888 = vpack.c.bf16 %v866, %v865
    %v889 = vpack.c.bf16 %v868, %v867
    %v890 = vpack.c.bf16 %v870, %v869
    %v891 = vpack.c.bf16 %v872, %v871
    %v892 = vpack.c.bf16 %v874, %v873
    %v893 = vpack.c.bf16 %v876, %v875
    %v894 = vpack.c.bf16 %v878, %v877
    %895 = vset.pattern.permute.xlu0 3
    %896 = vperm.xlu0 %895, %v50
    %v897 = vpop.permute.xlu0 %896
    %899 = vset.pattern.permute.xlu0 3
    %900 = vperm.xlu0 %899, %v51
    %v901 = vpop.permute.xlu0 %900
    %903 = vset.pattern.permute.xlu0 3
    %904 = vperm.xlu0 %903, %v52
    %v905 = vpop.permute.xlu0 %904
    %907 = vset.pattern.permute.xlu0 3
    %908 = vperm.xlu0 %907, %v53
    %v909 = vpop.permute.xlu0 %908
    %911 = vset.pattern.permute.xlu0 3
    %912 = vperm.xlu0 %911, %v54
    %v913 = vpop.permute.xlu0 %912
    %915 = vset.pattern.permute.xlu0 3
    %916 = vperm.xlu0 %915, %v55
    %v917 = vpop.permute.xlu0 %916
    %919 = vset.pattern.permute.xlu0 3
    %920 = vperm.xlu0 %919, %v56
    %v921 = vpop.permute.xlu0 %920
    %923 = vset.pattern.permute.xlu0 3
    %924 = vperm.xlu0 %923, %v57
    %v925 = vpop.permute.xlu0 %924
    %v935 = vunpack.c.l.b16 %v879
    %v936 = vunpack.c.l.b16 %v880
    %v937 = vunpack.c.l.b16 %v881
    %v938 = vunpack.c.l.b16 %v882
    %v939 = vunpack.c.l.b16 %v883
    %v940 = vunpack.c.l.b16 %v884
    %v941 = vunpack.c.l.b16 %v885
    %v942 = vunpack.c.l.b16 %v886
    %v943 = vpack.c.b16 %v936, %v935
    %v944 = vpack.c.b16 %v938, %v937
    %v945 = vpack.c.b16 %v940, %v939
    %v946 = vpack.c.b16 %v942, %v941
    %951 = vmatprep.subr.bf16.mxu0 0
    %952 = vmatpush1.bf16.msra.mxu0 %v887
    %953 = vmatprep.subr.bf16.mxu0 0
    %954 = vmatpush1.bf16.msra.mxu0 %v888
    %955 = vmatprep.subr.bf16.mxu0 0
    %956 = vmatpush1.bf16.msra.mxu0 %v889
    %957 = vmatprep.subr.bf16.mxu0 0
    %958 = vmatpush1.bf16.msra.mxu0 %v890
    %959 = vmatprep.subr.bf16.mxu0 0
    %960 = vmatpush1.bf16.msra.mxu0 %v891
    %961 = vmatprep.subr.bf16.mxu0 0
    %962 = vmatpush1.bf16.msra.mxu0 %v892
    %963 = vmatprep.subr.bf16.mxu0 0
    %964 = vmatpush1.bf16.msra.mxu0 %v893
    %965 = vmatprep.subr.bf16.mxu0 0
    %966 = vmatpush1.bf16.msra.mxu0 %v894
    %967 = vmatprep.subr.bf16.mxu0 0
    %968 = vmatpush1.bf16.msra.mxu0 0
    %969 = vmatprep.subr.bf16.mxu0 0
    %970 = vmatpush1.bf16.msra.mxu0 0
    %971 = vmatprep.subr.bf16.mxu0 0
    %972 = vmatpush1.bf16.msra.mxu0 0
    %973 = vmatprep.subr.bf16.mxu0 0
    %974 = vmatpush1.bf16.msra.mxu0 0
    %975 = vmatprep.subr.bf16.mxu0 0
    %976 = vmatpush1.bf16.msra.mxu0 0
    %977 = vmatprep.subr.bf16.mxu0 0
    %978 = vmatpush1.bf16.msra.mxu0 0
    %979 = vmatprep.subr.bf16.mxu0 0
    %980 = vmatpush1.bf16.msra.mxu0 0
    %981 = vmatprep.subr.bf16.mxu0 0
    %982 = vmatpush1.bf16.msra.mxu0 0
    %983 = vmatprep.mubr.bf16.mxu0 0
    %984 = vmatmul.mubr.bf16.gmra.mrb[0].mxu0 %v943
    %v985 = vpop.f32.mrb[0].mxu0
    %v986 = vadd.f32 %v897, %v985
    %v987 = vpop.f32.mrb[0].mxu0
    %v988 = vpop.f32.mrb[0].mxu0
    %v989 = vadd.f32 %v901, %v988
    %v990 = vpop.f32.mrb[0].mxu0
    %991 = vmatprep.mubr.bf16.mxu0 0
    %992 = vmatmul.mubr.bf16.gmra.mrb[0].mxu0 %v944
    %v993 = vpop.f32.mrb[0].mxu0
    %v994 = vadd.f32 %v905, %v993
    %v995 = vpop.f32.mrb[0].mxu0
    %v996 = vpop.f32.mrb[0].mxu0
    %v997 = vadd.f32 %v909, %v996
    %v998 = vpop.f32.mrb[0].mxu0
    %999 = vmatprep.mubr.bf16.mxu0 0
    %1000 = vmatmul.mubr.bf16.gmra.mrb[0].mxu0 %v945
    %v1001 = vpop.f32.mrb[0].mxu0
    %v1002 = vadd.f32 %v913, %v1001
    %v1003 = vpop.f32.mrb[0].mxu0
    %v1004 = vpop.f32.mrb[0].mxu0
    %v1005 = vadd.f32 %v917, %v1004
    %v1006 = vpop.f32.mrb[0].mxu0
    %1007 = vmatprep.mubr.bf16.mxu0 0
    %1008 = vmatmul.mubr.bf16.gmra.mrb[0].mxu0 %v946
    %v1009 = vpop.f32.mrb[0].mxu0
    %v1010 = vadd.f32 %v921, %v1009
    %v1011 = vpop.f32.mrb[0].mxu0
    %v1012 = vpop.f32.mrb[0].mxu0
    %v1013 = vadd.f32 %v925, %v1012
    %v1014 = vpop.f32.mrb[0].mxu0
    %1015 = vdwg.mxu0
    %v1016 = vmax.f32 %v986, 0.0
    %v1017 = vmax.f32 %v989, 0.0
    %v1018 = vmax.f32 %v994, 0.0
    %v1019 = vmax.f32 %v997, 0.0
    %v1020 = vmax.f32 %v1002, 0.0
    %v1021 = vmax.f32 %v1005, 0.0
    %v1022 = vmax.f32 %v1010, 0.0
    %v1023 = vmax.f32 %v1013, 0.0
    %v1024 = vld [vmem:[#allocation2 + $0xa0] sm:$0xf]
    %v1025 = vld [vmem:[#allocation2 + $0xa4] sm:$0xf]
    %v1026 = vld [vmem:[#allocation2 + $0xa8] sm:$0xf]
    %v1027 = vld [vmem:[#allocation2 + $0xac] sm:$0xf]
    %v1028 = vld [vmem:[#allocation2 + $0xb0] sm:$0xf]
    %v1029 = vld [vmem:[#allocation2 + $0xb4] sm:$0xf]
    %v1030 = vld [vmem:[#allocation2 + $0xb8] sm:$0xf]
    %v1031 = vld [vmem:[#allocation2 + $0xbc] sm:$0xf]
    %v1032 = vpack.c.bf16 %v1017, %v1016
    %v1033 = vpack.c.bf16 %v1019, %v1018
    %v1034 = vpack.c.bf16 %v1021, %v1020
    %v1035 = vpack.c.bf16 %v1023, %v1022
    %v1044 = vunpack.c.l.b16 %v1024
    %v1045 = vunpack.c.l.b16 %v1025
    %v1046 = vunpack.c.l.b16 %v1026
    %v1047 = vunpack.c.l.b16 %v1027
    %v1048 = vunpack.c.l.b16 %v1028
    %v1049 = vunpack.c.l.b16 %v1029
    %v1050 = vunpack.c.l.b16 %v1030
    %v1051 = vunpack.c.l.b16 %v1031
    %v1052 = vpack.c.b16 %v1045, %v1044
    %v1053 = vpack.c.b16 %v1047, %v1046
    %v1054 = vpack.c.b16 %v1049, %v1048
    %v1055 = vpack.c.b16 %v1051, %v1050
    %v1057 = vsel %vm272, %v1052, 0
    %v1060 = vsel %vm272, %v1053, 0
    %v1063 = vsel %vm272, %v1054, 0
    %v1066 = vsel %vm272, %v1055, 0
    %1068 = vmatprep.subr.bf16.mxu0 0
    %1069 = vmatpush1.bf16.msra.mxu0 %v1032
    %1070 = vmatprep.subr.bf16.mxu0 0
    %1071 = vmatpush1.bf16.msra.mxu0 %v1033
    %1072 = vmatprep.subr.bf16.mxu0 0
    %1073 = vmatpush1.bf16.msra.mxu0 %v1034
    %1074 = vmatprep.subr.bf16.mxu0 0
    %1075 = vmatpush1.bf16.msra.mxu0 %v1035
    %1076 = vmatprep.subr.bf16.mxu0 0
    %1077 = vmatpush1.bf16.msra.mxu0 0
    %1078 = vmatprep.subr.bf16.mxu0 0
    %1079 = vmatpush1.bf16.msra.mxu0 0
    %1080 = vmatprep.subr.bf16.mxu0 0
    %1081 = vmatpush1.bf16.msra.mxu0 0
    %1082 = vmatprep.subr.bf16.mxu0 0
    %1083 = vmatpush1.bf16.msra.mxu0 0
    %1084 = vmatprep.subr.bf16.mxu0 0
    %1085 = vmatpush1.bf16.msra.mxu0 0
    %1086 = vmatprep.subr.bf16.mxu0 0
    %1087 = vmatpush1.bf16.msra.mxu0 0
    %1088 = vmatprep.subr.bf16.mxu0 0
    %1089 = vmatpush1.bf16.msra.mxu0 0
    %1090 = vmatprep.subr.bf16.mxu0 0
    %1091 = vmatpush1.bf16.msra.mxu0 0
    %1092 = vmatprep.subr.bf16.mxu0 0
    %1093 = vmatpush1.bf16.msra.mxu0 0
    %1094 = vmatprep.subr.bf16.mxu0 0
    %1095 = vmatpush1.bf16.msra.mxu0 0
    %1096 = vmatprep.subr.bf16.mxu0 0
    %1097 = vmatpush1.bf16.msra.mxu0 0
    %1098 = vmatprep.subr.bf16.mxu0 0
    %1099 = vmatpush1.bf16.msra.mxu0 0
    %1100 = vmatprep.mubr.bf16.mxu0 0
    %1101 = vmatmul.mubr.bf16.gmra.mrb[0].mxu0 %v1057
    %v1102 = vpop.f32.mrb[0].mxu0
    %v1103 = vadd.f32 %v555, %v1102
    %v1104 = vpop.f32.mrb[0].mxu0
    %v1105 = vpop.f32.mrb[0].mxu0
    %v1106 = vadd.f32 %v558, %v1105
    %v1107 = vpop.f32.mrb[0].mxu0
    %1108 = vmatprep.mubr.bf16.mxu0 0
    %1109 = vmatmul.mubr.bf16.gmra.mrb[0].mxu0 %v1060
    %v1110 = vpop.f32.mrb[0].mxu0
    %v1111 = vadd.f32 %v563, %v1110
    %v1112 = vpop.f32.mrb[0].mxu0
    %v1113 = vpop.f32.mrb[0].mxu0
    %v1114 = vadd.f32 %v566, %v1113
    %v1115 = vpop.f32.mrb[0].mxu0
    %1116 = vmatprep.mubr.bf16.mxu0 0
    %1117 = vmatmul.mubr.bf16.gmra.mrb[0].mxu0 %v1063
    %v1118 = vpop.f32.mrb[0].mxu0
    %v1119 = vadd.f32 %v571, %v1118
    %v1120 = vpop.f32.mrb[0].mxu0
    %v1121 = vpop.f32.mrb[0].mxu0
    %v1122 = vadd.f32 %v574, %v1121
    %v1123 = vpop.f32.mrb[0].mxu0
    %1124 = vmatprep.mubr.bf16.mxu0 0
    %1125 = vmatmul.mubr.bf16.gmra.mrb[0].mxu0 %v1066
    %v1126 = vpop.f32.mrb[0].mxu0
    %v1127 = vadd.f32 %v579, %v1126
    %v1128 = vpop.f32.mrb[0].mxu0
    %v1129 = vpop.f32.mrb[0].mxu0
    %v1130 = vadd.f32 %v582, %v1129
    %v1131 = vpop.f32.mrb[0].mxu0
    %1132 = vdwg.mxu0
    %v1133 = vmax.f32 %v1103, 0.0
    %v1134 = vmax.f32 %v1106, 0.0
    %v1135 = vmax.f32 %v1111, 0.0
    %v1136 = vmax.f32 %v1114, 0.0
    %v1137 = vmax.f32 %v1119, 0.0
    %v1138 = vmax.f32 %v1122, 0.0
    %v1139 = vmax.f32 %v1127, 0.0
    %v1140 = vmax.f32 %v1130, 0.0
    %v1141 = vld [vmem:[#allocation2 + $0xe0] sm:$0x1]
    %v1142 = vpack.c.bf16 %v1134, %v1133
    %v1143 = vpack.c.bf16 %v1136, %v1135
    %v1144 = vpack.c.bf16 %v1138, %v1137
    %v1145 = vpack.c.bf16 %v1140, %v1139
    %v1146 = vld [vmem:[%s4] sm:$0x1]
    %1148 = vset.pattern.permute.xlu0 5
    %1149 = vperm.xlu0 %1148, %v1146
    %v1150 = vpop.permute.xlu0 %1149
    %v1153 = vsel %vm272, %v1141, 0
    %1155 = vmatprep.subr.bf16.mxu0 0
    %1156 = vmatpush1.bf16.msra.mxu0 %v1142
    %1157 = vmatprep.subr.bf16.mxu0 0
    %1158 = vmatpush1.bf16.msra.mxu0 %v1143
    %1159 = vmatprep.subr.bf16.mxu0 0
    %1160 = vmatpush1.bf16.msra.mxu0 %v1144
    %1161 = vmatprep.subr.bf16.mxu0 0
    %1162 = vmatpush1.bf16.msra.mxu0 %v1145
    %1163 = vmatprep.subr.bf16.mxu0 0
    %1164 = vmatpush1.bf16.msra.mxu0 0
    %1165 = vmatprep.subr.bf16.mxu0 0
    %1166 = vmatpush1.bf16.msra.mxu0 0
    %1167 = vmatprep.subr.bf16.mxu0 0
    %1168 = vmatpush1.bf16.msra.mxu0 0
    %1169 = vmatprep.subr.bf16.mxu0 0
    %1170 = vmatpush1.bf16.msra.mxu0 0
    %1171 = vmatprep.subr.bf16.mxu0 0
    %1172 = vmatpush1.bf16.msra.mxu0 0
    %1173 = vmatprep.subr.bf16.mxu0 0
    %1174 = vmatpush1.bf16.msra.mxu0 0
    %1175 = vmatprep.subr.bf16.mxu0 0
    %1176 = vmatpush1.bf16.msra.mxu0 0
    %1177 = vmatprep.subr.bf16.mxu0 0
    %1178 = vmatpush1.bf16.msra.mxu0 0
    %1179 = vmatprep.subr.bf16.mxu0 0
    %1180 = vmatpush1.bf16.msra.mxu0 0
    %1181 = vmatprep.subr.bf16.mxu0 0
    %1182 = vmatpush1.bf16.msra.mxu0 0
    %1183 = vmatprep.subr.bf16.mxu0 0
    %1184 = vmatpush1.bf16.msra.mxu0 0
    %1185 = vmatprep.subr.bf16.mxu0 0
    %1186 = vmatpush1.bf16.msra.mxu0 0
    %1187 = vmatprep.mubr.bf16.mxu0 0
    %1188 = vmatmul.mubr.bf16.gmra.mrb[0].mxu0 %v1153
    %v1189 = vpop.f32.mrb[0].mxu0
    %v1190 = vadd.f32 %v1150, %v1189
    %v1191 = vpop.f32.mrb[0].mxu0
    %v1192 = vpop.f32.mrb[0].mxu0
    %v1193 = vpop.f32.mrb[0].mxu0
    %1194 = vdwg.mxu0
    %1195 = vst [vmem:[#allocation5] sm:$0x1] %v1190
    // Predicated region
    $region26: #{tpu_custom_call.1} parent=1 // pred_check
      _
    $region27: #{tpu_custom_call.1} parent=1 // pred_check_branch
      %1197 = sbr.rel (0) target = $region29
    $region28: #{tpu_custom_call.1} parent=1 // pred_region
      %s1199 = ssub.s32 16, 16
      %1200 = vsyncadd [#allocation4], %s1199
      %s1202 = sshll.u32 [#allocation5], 4
      %s1203 = int_to_ptr.vmem [resolvable:$true] %s1202
      %1205 = dma.vmem_to_hbm [thread:$0]  %s1203, 16, %s5, [#allocation4]
    $region29: #{tpu_custom_call.1} parent=1 // pred_fallthru
      _
    // Predicated region
    $region30: #{tpu_custom_call.1} parent=1 // pred_check
      _
    $region31: #{tpu_custom_call.1} parent=1 // pred_check_branch
      %1207 = sbr.rel (0) target = $region33
    $region32: #{tpu_custom_call.1} parent=1 // pred_region
      %1208 = dma.done [#allocation4], 16
    $region33: #{tpu_custom_call.1} parent=1 // pred_fallthru
      _
    %1209 = vsyncpa [#allocation3], 1
    %1210 = vsyncpa [#allocation4], 1

</llo_original>
